<compile_context>
chip_gen: v6e
topology: v6e:2x2x1
jax: 0.10.0
libtpu: 0.0.40
codegen_flags: <defaults>
</compile_context>

<pallas_src>
import math

import jax
import jax.numpy as jnp
from jax.experimental import pallas as pl
from jax.experimental.pallas import tpu as pltpu


def decoder_kernel(ainv_ref, z_ref, wa_ref, w1t_ref, b1e_ref, w2_ref, b2_ref,
                   out_ref):
    # ainv_ref : (d, d)        = inverse(I - adj_A^T), precomputed in wrapper
    # z_ref    : (tb, d, zd)   block of tb batch samples (natural layout)
    # wa_ref   : (1, zd)
    # w1t_ref  : (zd, hidden)  = W1^T
    # b1e_ref  : (1, hidden)   = b1 - wa @ W1^T   (folds the trailing "- wa")
    # w2_ref   : (od, hidden)  PyTorch layout (used for the transposed matmul)
    # b2_ref   : (od, 1)
    # out_ref  : (od, tb*d)    transposed, lane-dense output block
    tb, d, zd = z_ref.shape

    zw = z_ref[...] + wa_ref[...]                                   # (tb, d, zd)

    # mat = A_inv @ (z + wa), contracting over the node dim, as ONE 2-D dot.
    zw_r = zw.transpose(1, 0, 2).reshape(d, tb * zd)                # (d, tb*zd)
    m = jnp.dot(ainv_ref[...], zw_r,
                preferred_element_type=jnp.float32)                 # (d, tb*zd)
    mat_rows = m.reshape(d, tb, zd).transpose(1, 0, 2).reshape(tb * d, zd)

    # MLP over flattened (batch*node) rows; "- wa" lives inside b1_eff.
    h = jnp.dot(mat_rows, w1t_ref[...],
                preferred_element_type=jnp.float32) + b1e_ref[...]  # (tb*d, H)
    h = jnp.maximum(h, 0.0)

    # Last layer computed transposed so the store is lane-dense:
    #   out^T = W2 @ h^T   -> (od, tb*d)
    out_t = jnp.einsum('oh,rh->or', w2_ref[...], h,
                       preferred_element_type=jnp.float32) + b2_ref[...]
    out_ref[...] = out_t.astype(out_ref.dtype)


def decoder_forward(z, adj_A, wa, w1, b1, w2, b2, *, tb=None):
    """DAG-GNN Decoder forward.

    z     : [B, d, input_dim]
    adj_A : [d, d]
    wa    : [input_dim]
    w1    : [hidden, input_dim]   (PyTorch nn.Linear layout)
    b1    : [hidden]
    w2    : [output_dim, hidden]
    b2    : [output_dim]
    """
    B, d, zd = z.shape
    hidden = w1.shape[0]
    od = w2.shape[0]

    # ---- batch-invariant preprocessing, hoisted out of the gridded kernel ----
    # TODO(synk): torch.inverse has no Pallas primitive; it is d x d and
    # batch-independent, so it is computed once here with jnp.linalg.inv.
    eye = jnp.eye(d, dtype=jnp.float32)
    a_inv = jnp.linalg.inv(eye - adj_A.T.astype(jnp.float32))

    wa_f = wa.astype(jnp.float32)
    w1_t = w1.T.astype(jnp.float32)                         # (zd, hidden)
    b1_eff = (b1.astype(jnp.float32) - wa_f @ w1_t).reshape(1, hidden)
    w2_f = w2.astype(jnp.float32)                           # (od, hidden)
    b2_col = b2.astype(jnp.float32).reshape(od, 1)
    wa_2d = wa_f.reshape(1, zd)

    # ---- batch tiling: tb samples (tb*d flattened rows) per grid step ----
    if tb is None:
        base = 128 // math.gcd(d, 128)       # smallest tb with (tb*d) % 128 == 0
        if B <= base:
            tb = B                           # single step; blocks == full arrays
        else:
            tb = base
            # grow toward ~1024 flattened rows per step, but keep >=2 steps so
            # both v7x TensorCores get work on the "parallel" batch axis.
            while tb * d < 1024 and B >= 4 * tb:
                tb *= 2
    nblk = -(-B // tb)                       # cdiv
    if nblk > 1 and (tb * d) % 128:
        raise ValueError("tb*d must be a multiple of 128 when grid has >1 step")
    B_pad = nblk * tb

    z_f = z.astype(jnp.float32)
    if B_pad != B:
        z_f = jnp.pad(z_f, ((0, B_pad - B), (0, 0), (0, 0)))

    out_t = pl.pallas_call(
        decoder_kernel,
        out_shape=jax.ShapeDtypeStruct((od, B_pad * d), jnp.float32),
        grid_spec=pltpu.PrefetchScalarGridSpec(
            num_scalar_prefetch=0,
            grid=(nblk,),
            in_specs=[
                pl.BlockSpec((d, d), lambda b: (0, 0)),            # A_inv
                pl.BlockSpec((tb, d, zd), lambda b: (b, 0, 0)),    # z block
                pl.BlockSpec((1, zd), lambda b: (0, 0)),           # wa
                pl.BlockSpec((zd, hidden), lambda b: (0, 0)),      # W1^T
                pl.BlockSpec((1, hidden), lambda b: (0, 0)),       # b1_eff
                pl.BlockSpec((od, hidden), lambda b: (0, 0)),      # W2
                pl.BlockSpec((od, 1), lambda b: (0, 0)),           # b2
            ],
            out_specs=pl.BlockSpec((od, tb * d), lambda b: (0, b)),
        ),
        compiler_params=pltpu.CompilerParams(
            dimension_semantics=("parallel",)),   # batch blocks independent
    )(a_inv, z_f, wa_2d, w1_t, b1_eff, w2_f, b2_col)

    # (od, B_pad*d) -> (B, d, od); columns are ordered (sample, node).
    out = out_t.T.reshape(B_pad, d, od)[:B]
    return out


def reference_forward(z, adj_A, wa, w1, b1, w2, b2):
    d = adj_A.shape[0]
    a_inv = jnp.linalg.inv(jnp.eye(d, dtype=jnp.float32) - adj_A.T)
    mat_z = jnp.einsum('ij,bjk->bik', a_inv, z + wa) - wa
    h = jnp.maximum(jnp.einsum('bdi,hi->bdh', mat_z, w1) + b1, 0.0)
    out = jnp.einsum('bdh,oh->bdo', h, w2) + b2
    return out


def _run_case(key, B, d, input_dim, hidden, output_dim):
    k_z, k_adj, k_wa, k_w1, k_w2 = jax.random.split(key, 5)
    z = jax.random.normal(k_z, (B, d, input_dim), dtype=jnp.float32)
    adj_A = 0.1 * jax.random.normal(k_adj, (d, d), dtype=jnp.float32)
    wa = 0.1 * jax.random.normal(k_wa, (input_dim,), dtype=jnp.float32)

    # Decoder._init_weights: xavier_normal_ on Linear weights, biases = 0.
    std1 = (2.0 / (input_dim + hidden)) ** 0.5
    std2 = (2.0 / (hidden + output_dim)) ** 0.5
    w1 = std1 * jax.random.normal(k_w1, (hidden, input_dim), dtype=jnp.float32)
    b1 = jnp.zeros((hidden,), dtype=jnp.float32)
    w2 = std2 * jax.random.normal(k_w2, (output_dim, hidden), dtype=jnp.float32)
    b2 = jnp.zeros((output_dim,), dtype=jnp.float32)

    out = jax.block_until_ready(decoder_forward(z, adj_A, wa, w1, b1, w2, b2))
    ref = reference_forward(z, adj_A, wa, w1, b1, w2, b2)
    assert out.shape == ref.shape, (out.shape, ref.shape)
    assert jnp.allclose(out, ref, atol=2e-4, rtol=2e-4), \
        float(jnp.max(jnp.abs(out - ref)))


if __name__ == "__main__":
    key = jax.random.PRNGKey(0)
    k1, k2 = jax.random.split(key)

    # Small case (single grid step, blocks == full arrays).
    _run_case(k1, B=2, d=8, input_dim=4, hidden=32, output_dim=4)
    # Multi-block case: exercises grid>1, batch padding, lane-dense out blocks.
    _run_case(k2, B=40, d=8, input_dim=4, hidden=32, output_dim=4)

    print("KERNEL_OK")
</pallas_src>

<mosaic_0001>
module attributes {stable_mosaic.version = 11 : i64} {
  func.func @decoder_kernel(%arg0: i32, %arg1: memref<8x8xf32, #tpu.memory_space<vmem>>, %arg2: memref<2x8x4xf32, #tpu.memory_space<vmem>>, %arg3: memref<1x4xf32, #tpu.memory_space<vmem>>, %arg4: memref<4x32xf32, #tpu.memory_space<vmem>>, %arg5: memref<1x32xf32, #tpu.memory_space<vmem>>, %arg6: memref<4x32xf32, #tpu.memory_space<vmem>>, %arg7: memref<4x1xf32, #tpu.memory_space<vmem>>, %arg8: memref<4x16xf32, #tpu.memory_space<vmem>>) attributes {dimension_semantics = [#tpu.dimension_semantics<parallel>], iteration_bounds = array<i64: 1>, scalar_prefetch = 0 : i64, scratch_operands = 0 : i64, tpu.core_type = #tpu.core_type<tc>, window_params = [{pipeline_mode = #tpu.pipeline_mode<synchronous>, transform_indices = @transform_0, window_bounds = array<i64: 8, 8>}, {transform_indices = @transform_1, window_bounds = array<i64: 2, 8, 4>}, {pipeline_mode = #tpu.pipeline_mode<synchronous>, transform_indices = @transform_2, window_bounds = array<i64: 1, 4>}, {pipeline_mode = #tpu.pipeline_mode<synchronous>, transform_indices = @transform_3, window_bounds = array<i64: 4, 32>}, {pipeline_mode = #tpu.pipeline_mode<synchronous>, transform_indices = @transform_4, window_bounds = array<i64: 1, 32>}, {pipeline_mode = #tpu.pipeline_mode<synchronous>, transform_indices = @transform_5, window_bounds = array<i64: 4, 32>}, {pipeline_mode = #tpu.pipeline_mode<synchronous>, transform_indices = @transform_6, window_bounds = array<i64: 4, 1>}, {transform_indices = @transform_7, window_bounds = array<i64: 4, 16>}]} {
    %c0 = arith.constant 0 : index
    %c0_0 = arith.constant 0 : index
    %c0_1 = arith.constant 0 : index
    %0 = vector.load %arg2[%c0, %c0_0, %c0_1] : memref<2x8x4xf32, #tpu.memory_space<vmem>>, vector<2x8x4xf32>
    %c0_2 = arith.constant 0 : index
    %c0_3 = arith.constant 0 : index
    %1 = vector.load %arg3[%c0_2, %c0_3] : memref<1x4xf32, #tpu.memory_space<vmem>>, vector<1x4xf32>
    %2 = vector.shape_cast %1 : vector<1x4xf32> to vector<1x1x4xf32>
    %3 = vector.broadcast %2 : vector<1x1x4xf32> to vector<2x8x4xf32>
    %4 = arith.addf %0, %3 : vector<2x8x4xf32>
    %5 = tpu.transpose %4, [1, 0, 2] : vector<2x8x4xf32> -> vector<8x2x4xf32>
    %6 = vector.shape_cast %5 : vector<8x2x4xf32> to vector<8x8xf32>
    %c0_4 = arith.constant 0 : index
    %c0_5 = arith.constant 0 : index
    %7 = vector.load %arg1[%c0_4, %c0_5] : memref<8x8xf32, #tpu.memory_space<vmem>>, vector<8x8xf32>
    %cst = arith.constant dense<0.000000e+00> : vector<8x8xf32>
    %8 = tpu.matmul %7, %6, %cst {dimension_numbers = #tpu.dot_dimension_numbers<[1], [0], [0], [1], [0, 0, 1, 1], [], []>} : vector<8x8xf32>, vector<8x8xf32>, vector<8x8xf32> -> vector<8x8xf32>
    %9 = vector.shape_cast %8 : vector<8x8xf32> to vector<8x2x4xf32>
    %10 = tpu.transpose %9, [1, 0, 2] : vector<8x2x4xf32> -> vector<2x8x4xf32>
    %11 = vector.shape_cast %10 : vector<2x8x4xf32> to vector<16x4xf32>
    %c0_6 = arith.constant 0 : index
    %c0_7 = arith.constant 0 : index
    %12 = vector.load %arg4[%c0_6, %c0_7] : memref<4x32xf32, #tpu.memory_space<vmem>>, vector<4x32xf32>
    %cst_8 = arith.constant dense<0.000000e+00> : vector<16x32xf32>
    %13 = tpu.matmul %11, %12, %cst_8 {dimension_numbers = #tpu.dot_dimension_numbers<[1], [0], [0], [1], [0, 0, 1, 1], [], []>} : vector<16x4xf32>, vector<4x32xf32>, vector<16x32xf32> -> vector<16x32xf32>
    %c0_9 = arith.constant 0 : index
    %c0_10 = arith.constant 0 : index
    %14 = vector.load %arg5[%c0_9, %c0_10] : memref<1x32xf32, #tpu.memory_space<vmem>>, vector<1x32xf32>
    %15 = vector.broadcast %14 : vector<1x32xf32> to vector<16x32xf32>
    %16 = arith.addf %13, %15 : vector<16x32xf32>
    %cst_11 = arith.constant 0.000000e+00 : f32
    %17 = vector.broadcast %cst_11 : f32 to vector<16x32xf32>
    %18 = arith.maximumf %16, %17 : vector<16x32xf32>
    %c0_12 = arith.constant 0 : index
    %c0_13 = arith.constant 0 : index
    %19 = vector.load %arg6[%c0_12, %c0_13] : memref<4x32xf32, #tpu.memory_space<vmem>>, vector<4x32xf32>
    "tpu.trace_start"() <{level = 10 : i32, message = "oh,rh->or"}> : () -> ()
    %cst_14 = arith.constant dense<0.000000e+00> : vector<4x16xf32>
    %20 = tpu.matmul %19, %18, %cst_14 {dimension_numbers = #tpu.dot_dimension_numbers<[1], [1], [0], [0], [0, 0, 1, 0], [], []>} : vector<4x32xf32>, vector<16x32xf32>, vector<4x16xf32> -> vector<4x16xf32>
    "tpu.trace_stop"() : () -> ()
    %c0_15 = arith.constant 0 : index
    %c0_16 = arith.constant 0 : index
    %21 = vector.load %arg7[%c0_15, %c0_16] : memref<4x1xf32, #tpu.memory_space<vmem>>, vector<4x1xf32>
    %22 = vector.broadcast %21 : vector<4x1xf32> to vector<4x16xf32>
    %23 = arith.addf %20, %22 : vector<4x16xf32>
    %c0_17 = arith.constant 0 : index
    %c0_18 = arith.constant 0 : index
    %24 = vector.load %arg8[%c0_17, %c0_18] : memref<4x16xf32, #tpu.memory_space<vmem>>, vector<4x16xf32>
    tpu.vector_store %arg8[%c0_17, %c0_18], %23 {strides = array<i32>} : memref<4x16xf32, #tpu.memory_space<vmem>>, vector<4x16xf32>,
    return
  }
  func.func @transform_0(%arg0: i32) -> (i32, i32) {
    %c0_i32 = arith.constant 0 : i32
    %c0_i32_0 = arith.constant 0 : i32
    %c0_i32_1 = arith.constant 0 : i32
    return %c0_i32, %c0_i32_0 : i32, i32
  }
  func.func @transform_1(%arg0: i32) -> (i32, i32, i32) {
    %c0_i32 = arith.constant 0 : i32
    %c0_i32_0 = arith.constant 0 : i32
    %c0_i32_1 = arith.constant 0 : i32
    return %arg0, %c0_i32, %c0_i32_0 : i32, i32, i32
  }
  func.func @transform_2(%arg0: i32) -> (i32, i32) {
    %c0_i32 = arith.constant 0 : i32
    %c0_i32_0 = arith.constant 0 : i32
    %c0_i32_1 = arith.constant 0 : i32
    return %c0_i32, %c0_i32_0 : i32, i32
  }
  func.func @transform_3(%arg0: i32) -> (i32, i32) {
    %c0_i32 = arith.constant 0 : i32
    %c0_i32_0 = arith.constant 0 : i32
    %c0_i32_1 = arith.constant 0 : i32
    return %c0_i32, %c0_i32_0 : i32, i32
  }
  func.func @transform_4(%arg0: i32) -> (i32, i32) {
    %c0_i32 = arith.constant 0 : i32
    %c0_i32_0 = arith.constant 0 : i32
    %c0_i32_1 = arith.constant 0 : i32
    return %c0_i32, %c0_i32_0 : i32, i32
  }
  func.func @transform_5(%arg0: i32) -> (i32, i32) {
    %c0_i32 = arith.constant 0 : i32
    %c0_i32_0 = arith.constant 0 : i32
    %c0_i32_1 = arith.constant 0 : i32
    return %c0_i32, %c0_i32_0 : i32, i32
  }
  func.func @transform_6(%arg0: i32) -> (i32, i32) {
    %c0_i32 = arith.constant 0 : i32
    %c0_i32_0 = arith.constant 0 : i32
    %c0_i32_1 = arith.constant 0 : i32
    return %c0_i32, %c0_i32_0 : i32, i32
  }
  func.func @transform_7(%arg0: i32) -> (i32, i32) {
    %c0_i32 = arith.constant 0 : i32
    %c0_i32_0 = arith.constant 0 : i32
    return %c0_i32, %arg0 : i32, i32
  }
}

</mosaic_0001>

<llo_original>
// kernel: tpu_custom_call.1
$region0: #{tpu_custom_call.1}
  #allocation0 [shape = 'u32[]', space=smem, size = 0x4, offset = 0x4, fixed_abs, tag = 'smem constant byte address 0x4 - core index']
  #allocation1 [shape = 'u32[144,128]{1,0:T(1,128)}', space=vmem, size = 0x12000, scoped, tag = 'internal scratch']
  %s0 = inlined_call_operand.vmem [shape: f32[8,8], index: 0, kind: input, shape index: {}]
  %s1 = inlined_call_operand.vmem [shape: f32[2,8,4], index: 1, kind: input, shape index: {}]
  %s2 = inlined_call_operand.vmem [shape: f32[1,4], index: 2, kind: input, shape index: {}]
  %s3 = inlined_call_operand.vmem [shape: f32[4,32], index: 3, kind: input, shape index: {}]
  %s4 = inlined_call_operand.vmem [shape: f32[1,32], index: 4, kind: input, shape index: {}]
  %s5 = inlined_call_operand.vmem [shape: f32[4,32], index: 5, kind: input, shape index: {}]
  %s6 = inlined_call_operand.vmem [shape: f32[4,1], index: 6, kind: input, shape index: {}]
  %s7 = inlined_call_operand.hbm [shape: f32[4,16], index: 7, kind: output, shape index: {}]
  %s8 = sld [smem:[#allocation0]]
  $region38: #{tpu_custom_call.1} parent=0
    _
  %s10 = ssub.s32 1, %s8
  %s11 = scalar_select 0, %s10, %s8
  $region1: #{tpu_custom_call.1} parent=0
    #allocation2 [shape = 'u8[2048]{0}', space=vmem, size = 0x800, scoped, tag = 'output window, operand 0, single buffered']
    #allocation3 [shape = 's32[1]{0}', space=sflag, size = 0x4, scoped, tag = 'scoped memory for tpu_custom_call.1']
    %12 = vsyncpa [#allocation3], 0
    // Predicated region
    $region2: #{tpu_custom_call.1} parent=1 // pred_check
      _
    $region3: #{tpu_custom_call.1} parent=1 // pred_check_branch
      %14 = sbr.rel (0) target = $region5
    $region4: #{tpu_custom_call.1} parent=1 // pred_region
      _
    $region5: #{tpu_custom_call.1} parent=1 // pred_fallthru
      _
    // Predicated region
    $region6: #{tpu_custom_call.1} parent=1 // pred_check
      _
    $region7: #{tpu_custom_call.1} parent=1 // pred_check_branch
      %16 = sbr.rel (0) target = $region9
    $region8: #{tpu_custom_call.1} parent=1 // pred_region
      _
    $region9: #{tpu_custom_call.1} parent=1 // pred_fallthru
      _
    // Predicated region
    $region10: #{tpu_custom_call.1} parent=1 // pred_check
      _
    $region11: #{tpu_custom_call.1} parent=1 // pred_check_branch
      %18 = sbr.rel (0) target = $region13
    $region12: #{tpu_custom_call.1} parent=1 // pred_region
      _
    $region13: #{tpu_custom_call.1} parent=1 // pred_fallthru
      _
    // Predicated region
    $region14: #{tpu_custom_call.1} parent=1 // pred_check
      _
    $region15: #{tpu_custom_call.1} parent=1 // pred_check_branch
      %20 = sbr.rel (0) target = $region17
    $region16: #{tpu_custom_call.1} parent=1 // pred_region
      _
    $region17: #{tpu_custom_call.1} parent=1 // pred_fallthru
      _
    // Predicated region
    $region18: #{tpu_custom_call.1} parent=1 // pred_check
      _
    $region19: #{tpu_custom_call.1} parent=1 // pred_check_branch
      %22 = sbr.rel (0) target = $region21
    $region20: #{tpu_custom_call.1} parent=1 // pred_region
      _
    $region21: #{tpu_custom_call.1} parent=1 // pred_fallthru
      _
    // Predicated region
    $region22: #{tpu_custom_call.1} parent=1 // pred_check
      _
    $region23: #{tpu_custom_call.1} parent=1 // pred_check_branch
      %24 = sbr.rel (0) target = $region25
    $region24: #{tpu_custom_call.1} parent=1 // pred_region
      _
    $region25: #{tpu_custom_call.1} parent=1 // pred_fallthru
      _
    // Predicated region
    $region26: #{tpu_custom_call.1} parent=1 // pred_check
      _
    $region27: #{tpu_custom_call.1} parent=1 // pred_check_branch
      %26 = sbr.rel (0) target = $region29
    $region28: #{tpu_custom_call.1} parent=1 // pred_region
      _
    $region29: #{tpu_custom_call.1} parent=1 // pred_fallthru
      _
    %v27 = vld [vmem:[%s1] sm:$0xff]
    %v28 = vld [vmem:[%s1 + $0x8] sm:$0xff]
    %v29 = vld [vmem:[%s2] sm:$0x1]
    %v31 = vlaneseq
    %v32 = vshrl.u32 %v31, 7
    %v33 = vsub.s32 0, %v32
    %v34 = vrot.slane %v29, %v33
    %v36 = vadd.f32 %v27, %v34
    %v37 = vadd.f32 %v28, %v34
    %v38 = vcombine.high %v36, 0.0
    %v40 = vunpack.c.l.s4 1983009808
    %v41 = vunpack.c.0.s8 %v40
    %v42 = vlaneseq
    %v43 = vshrl.u32 %v42, 7
    %v44 = vsub.s32 %v41, %v43
    %v45 = vrot.slane %v36, %v44
    %v47 = vunpack.c.l.s4 1983009808
    %v48 = vunpack.c.0.s8 %v47
    %v49 = vlaneseq
    %v50 = vshrl.u32 %v49, 7
    %v51 = vsub.s32 %v48, %v50
    %v52 = vrot.slane %v38, %v51
    %v53 = vcombine.high %v37, 0.0
    %v55 = vunpack.c.l.s4 1983009808
    %v56 = vunpack.c.0.s8 %v55
    %v57 = vlaneseq
    %v58 = vshrl.u32 %v57, 7
    %v59 = vsub.s32 %v56, %v58
    %v60 = vrot.slane %v37, %v59
    %v62 = vunpack.c.l.s4 1983009808
    %v63 = vunpack.c.0.s8 %v62
    %v64 = vlaneseq
    %v65 = vshrl.u32 %v64, 7
    %v66 = vsub.s32 %v63, %v65
    %v67 = vrot.slane %v53, %v66
    %v68 = vcombine.low %v45, %v60
    %v69 = vcombine.high %v45, %v60
    %v71 = vunpack.c.l.s4 1934713408
    %v72 = vunpack.c.0.s8 %v71
    %v73 = vlaneseq
    %v74 = vshrl.u32 %v73, 7
    %v75 = vsub.s32 %v72, %v74
    %v76 = vrot.slane %v68, %v75
    %v78 = vunpack.c.l.s4 1934713408
    %v79 = vunpack.c.0.s8 %v78
    %v80 = vlaneseq
    %v81 = vshrl.u32 %v80, 7
    %v82 = vsub.s32 %v79, %v81
    %v83 = vrot.slane %v69, %v82
    %v84 = vcombine.low %v52, %v67
    %v85 = vcombine.high %v52, %v67
    %v87 = vunpack.c.l.s4 1934713408
    %v88 = vunpack.c.0.s8 %v87
    %v89 = vlaneseq
    %v90 = vshrl.u32 %v89, 7
    %v91 = vsub.s32 %v88, %v90
    %v92 = vrot.slane %v84, %v91
    %v94 = vunpack.c.l.s4 1934713408
    %v95 = vunpack.c.0.s8 %v94
    %v96 = vlaneseq
    %v97 = vshrl.u32 %v96, 7
    %v98 = vsub.s32 %v95, %v97
    %v99 = vrot.slane %v85, %v98
    %v100 = vcombine.high %v76, 0.0
    %v101 = vcombine.high %v83, 0.0
    %v102 = vcombine.high %v92, 0.0
    %v103 = vcombine.high %v99, 0.0
    %v104 = vcombine.low %v76, %v83
    %v106 = vunpack.c.l.s4 1983009808
    %v107 = vunpack.c.0.s8 %v106
    %v108 = vlaneseq
    %v109 = vshrl.u32 %v108, 7
    %v110 = vsub.s32 %v107, %v109
    %v111 = vrot.slane %v104, %v110
    %v112 = vcombine.low %v100, %v101
    %v114 = vunpack.c.l.s4 1983009808
    %v115 = vunpack.c.0.s8 %v114
    %v116 = vlaneseq
    %v117 = vshrl.u32 %v116, 7
    %v118 = vsub.s32 %v115, %v117
    %v119 = vrot.slane %v112, %v118
    %v120 = vcombine.low %v92, %v99
    %v122 = vunpack.c.l.s4 1983009808
    %v123 = vunpack.c.0.s8 %v122
    %v124 = vlaneseq
    %v125 = vshrl.u32 %v124, 7
    %v126 = vsub.s32 %v123, %v125
    %v127 = vrot.slane %v120, %v126
    %v128 = vcombine.low %v102, %v103
    %v130 = vunpack.c.l.s4 1983009808
    %v131 = vunpack.c.0.s8 %v130
    %v132 = vlaneseq
    %v133 = vshrl.u32 %v132, 7
    %v134 = vsub.s32 %v131, %v133
    %v135 = vrot.slane %v128, %v134
    %v136 = vcombine.low %v111, %v119
    %v138 = vunpack.c.l.s4 1934713408
    %v139 = vunpack.c.0.s8 %v138
    %v140 = vlaneseq
    %v141 = vshrl.u32 %v140, 7
    %v142 = vsub.s32 %v139, %v141
    %v143 = vrot.slane %v136, %v142
    %v144 = vcombine.low %v127, %v135
    %v146 = vunpack.c.l.s4 1934713408
    %v147 = vunpack.c.0.s8 %v146
    %v148 = vlaneseq
    %v149 = vshrl.u32 %v148, 7
    %v150 = vsub.s32 %v147, %v149
    %v151 = vrot.slane %v144, %v150
    %v152 = vcombine.low %v143, %v151
    %v153 = vcombine.high %v143, %v151
    %155 = vrot.lane.b32.xlu0 %v153, 4
    %v156 = vpop.permute.xlu0 %155
    %vm158 = vcmask 31744
    %v159 = vsel %vm158, %v152, %v156
    %v160 = vld [vmem:[%s0] sm:$0xff]
    %vm161 = vcmask 64512
    %v163 = vsel %vm161, %v160, 0
    %165 = vmatprep.subr.mxu0 0.0
    %166 = vmatpush1.msra.mxu0 0.0
    %167 = vmatprep.subr.mxu0 0.0
    %168 = vmatpush1.msra.mxu0 0.0
    %169 = vmatprep.subr.mxu0 0.0
    %170 = vmatpush1.msra.mxu0 0.0
    %171 = vmatprep.subr.mxu0 0.0
    %172 = vmatpush1.msra.mxu0 0.0
    %173 = vmatprep.subr.mxu0 0.0
    %174 = vmatpush1.msra.mxu0 0.0
    %175 = vmatprep.subr.mxu0 0.0
    %176 = vmatpush1.msra.mxu0 0.0
    %177 = vmatprep.subr.mxu0 0.0
    %178 = vmatpush1.msra.mxu0 0.0
    %179 = vmatprep.subr.mxu0 0.0
    %180 = vmatpush1.msra.mxu0 0.0
    %181 = vmatprep.subr.mxu0 0.0
    %182 = vmatpush1.msra.mxu0 0.0
    %183 = vmatprep.subr.mxu0 0.0
    %184 = vmatpush1.msra.mxu0 0.0
    %185 = vmatprep.subr.mxu0 0.0
    %186 = vmatpush1.msra.mxu0 0.0
    %187 = vmatprep.subr.mxu0 0.0
    %188 = vmatpush1.msra.mxu0 0.0
    %189 = vmatprep.subr.mxu0 0.0
    %190 = vmatpush1.msra.mxu0 0.0
    %191 = vmatprep.subr.mxu0 0.0
    %192 = vmatpush1.msra.mxu0 0.0
    %193 = vmatprep.subr.mxu0 0.0
    %194 = vmatpush1.msra.mxu0 0.0
    %195 = vmatprep.subr.mxu0 0.0
    %196 = vmatpush1.msra.mxu0 %v159
    %197 = vmatprep.subr.mxu0 0.0
    %198 = vmatpush2.msra.mxu0 0.0
    %199 = vmatprep.subr.mxu0 0.0
    %200 = vmatpush2.msra.mxu0 0.0
    %201 = vmatprep.subr.mxu0 0.0
    %202 = vmatpush2.msra.mxu0 0.0
    %203 = vmatprep.subr.mxu0 0.0
    %204 = vmatpush2.msra.mxu0 0.0
    %205 = vmatprep.subr.mxu0 0.0
    %206 = vmatpush2.msra.mxu0 0.0
    %207 = vmatprep.subr.mxu0 0.0
    %208 = vmatpush2.msra.mxu0 0.0
    %209 = vmatprep.subr.mxu0 0.0
    %210 = vmatpush2.msra.mxu0 0.0
    %211 = vmatprep.subr.mxu0 0.0
    %212 = vmatpush2.msra.mxu0 0.0
    %213 = vmatprep.subr.mxu0 0.0
    %214 = vmatpush2.msra.mxu0 0.0
    %215 = vmatprep.subr.mxu0 0.0
    %216 = vmatpush2.msra.mxu0 0.0
    %217 = vmatprep.subr.mxu0 0.0
    %218 = vmatpush2.msra.mxu0 0.0
    %219 = vmatprep.subr.mxu0 0.0
    %220 = vmatpush2.msra.mxu0 0.0
    %221 = vmatprep.subr.mxu0 0.0
    %222 = vmatpush2.msra.mxu0 0.0
    %223 = vmatprep.subr.mxu0 0.0
    %224 = vmatpush2.msra.mxu0 0.0
    %225 = vmatprep.subr.mxu0 0.0
    %226 = vmatpush2.msra.mxu0 0.0
    %227 = vmatprep.subr.mxu0 0.0
    %228 = vmatpush2.msra.mxu0 0.0
    %229 = vmatprep.mubr.f32.mxu0 0.0
    %230 = vmatmul.mubr.f32.gmra.mxu0 %v163
    %v231 = vpop.f32.mrf.mxu0
    %v232 = vadd.f32 0.0, %v231
    %v233 = vpop.f32.mrf.mxu0
    %234 = vdwg.mxu0
    %236 = vrot.lane.b32.xlu0 %v232, 124
    %v237 = vpop.permute.xlu0 %236
    %v239 = vcombine.high %v232, 0.0
    %v241 = vunpack.c.l.s4 1983009808
    %v242 = vunpack.c.0.s8 %v241
    %v243 = vlaneseq
    %v244 = vshrl.u32 %v243, 7
    %v245 = vsub.s32 %v242, %v244
    %v246 = vrot.slane %v232, %v245
    %v248 = vunpack.c.l.s4 1983009808
    %v249 = vunpack.c.0.s8 %v248
    %v250 = vlaneseq
    %v251 = vshrl.u32 %v250, 7
    %v252 = vsub.s32 %v249, %v251
    %v253 = vrot.slane %v239, %v252
    %v254 = vcombine.high %v237, 0.0
    %v256 = vunpack.c.l.s4 1983009808
    %v257 = vunpack.c.0.s8 %v256
    %v258 = vlaneseq
    %v259 = vshrl.u32 %v258, 7
    %v260 = vsub.s32 %v257, %v259
    %v261 = vrot.slane %v237, %v260
    %v263 = vunpack.c.l.s4 1983009808
    %v264 = vunpack.c.0.s8 %v263
    %v265 = vlaneseq
    %v266 = vshrl.u32 %v265, 7
    %v267 = vsub.s32 %v264, %v266
    %v268 = vrot.slane %v254, %v267
    %v269 = vcombine.low %v246, %v261
    %v270 = vcombine.high %v246, %v261
    %v272 = vunpack.c.l.s4 1934713408
    %v273 = vunpack.c.0.s8 %v272
    %v274 = vlaneseq
    %v275 = vshrl.u32 %v274, 7
    %v276 = vsub.s32 %v273, %v275
    %v277 = vrot.slane %v269, %v276
    %v279 = vunpack.c.l.s4 1934713408
    %v280 = vunpack.c.0.s8 %v279
    %v281 = vlaneseq
    %v282 = vshrl.u32 %v281, 7
    %v283 = vsub.s32 %v280, %v282
    %v284 = vrot.slane %v270, %v283
    %v285 = vcombine.low %v253, %v268
    %v286 = vcombine.high %v253, %v268
    %v288 = vunpack.c.l.s4 1934713408
    %v289 = vunpack.c.0.s8 %v288
    %v290 = vlaneseq
    %v291 = vshrl.u32 %v290, 7
    %v292 = vsub.s32 %v289, %v291
    %v293 = vrot.slane %v285, %v292
    %v295 = vunpack.c.l.s4 1934713408
    %v296 = vunpack.c.0.s8 %v295
    %v297 = vlaneseq
    %v298 = vshrl.u32 %v297, 7
    %v299 = vsub.s32 %v296, %v298
    %v300 = vrot.slane %v286, %v299
    %v301 = vcombine.high %v277, 0.0
    %v302 = vcombine.high %v284, 0.0
    %v303 = vcombine.high %v293, 0.0
    %v304 = vcombine.high %v300, 0.0
    %v305 = vcombine.low %v277, %v284
    %v307 = vunpack.c.l.s4 1983009808
    %v308 = vunpack.c.0.s8 %v307
    %v309 = vlaneseq
    %v310 = vshrl.u32 %v309, 7
    %v311 = vsub.s32 %v308, %v310
    %v312 = vrot.slane %v305, %v311
    %v313 = vcombine.low %v301, %v302
    %v315 = vunpack.c.l.s4 1983009808
    %v316 = vunpack.c.0.s8 %v315
    %v317 = vlaneseq
    %v318 = vshrl.u32 %v317, 7
    %v319 = vsub.s32 %v316, %v318
    %v320 = vrot.slane %v313, %v319
    %v321 = vcombine.low %v293, %v300
    %v323 = vunpack.c.l.s4 1983009808
    %v324 = vunpack.c.0.s8 %v323
    %v325 = vlaneseq
    %v326 = vshrl.u32 %v325, 7
    %v327 = vsub.s32 %v324, %v326
    %v328 = vrot.slane %v321, %v327
    %v329 = vcombine.low %v303, %v304
    %v331 = vunpack.c.l.s4 1983009808
    %v332 = vunpack.c.0.s8 %v331
    %v333 = vlaneseq
    %v334 = vshrl.u32 %v333, 7
    %v335 = vsub.s32 %v332, %v334
    %v336 = vrot.slane %v329, %v335
    %v337 = vcombine.low %v312, %v320
    %v339 = vunpack.c.l.s4 1934713408
    %v340 = vunpack.c.0.s8 %v339
    %v341 = vlaneseq
    %v342 = vshrl.u32 %v341, 7
    %v343 = vsub.s32 %v340, %v342
    %v344 = vrot.slane %v337, %v343
    %v345 = vcombine.low %v328, %v336
    %v347 = vunpack.c.l.s4 1934713408
    %v348 = vunpack.c.0.s8 %v347
    %v349 = vlaneseq
    %v350 = vshrl.u32 %v349, 7
    %v351 = vsub.s32 %v348, %v350
    %v352 = vrot.slane %v345, %v351
    %v353 = vcombine.low %v344, %v352
    %v354 = vcombine.high %v344, %v352
    %v355 = vld [vmem:[%s3] sm:$0xf]
    %v356 = vld [vmem:[%s4] sm:$0x1]
    %v358 = vlaneseq
    %v359 = vshrl.u32 %v358, 7
    %v360 = vsub.s32 0, %v359
    %v361 = vrot.slane %v356, %v360
    %v364 = vsel %vm158, %v353, 0
    %v367 = vsel %vm158, %v354, 0
    %vm369 = vcmask 1043456
    %v371 = vsel %vm369, %v355, 0
    %373 = vmatprep.subr.mxu0 0.0
    %374 = vmatpush1.msra.mxu0 0.0
    %375 = vmatprep.subr.mxu0 0.0
    %376 = vmatpush1.msra.mxu0 0.0
    %377 = vmatprep.subr.mxu0 0.0
    %378 = vmatpush1.msra.mxu0 0.0
    %379 = vmatprep.subr.mxu0 0.0
    %380 = vmatpush1.msra.mxu0 0.0
    %381 = vmatprep.subr.mxu0 0.0
    %382 = vmatpush1.msra.mxu0 0.0
    %383 = vmatprep.subr.mxu0 0.0
    %384 = vmatpush1.msra.mxu0 0.0
    %385 = vmatprep.subr.mxu0 0.0
    %386 = vmatpush1.msra.mxu0 0.0
    %387 = vmatprep.subr.mxu0 0.0
    %388 = vmatpush1.msra.mxu0 0.0
    %389 = vmatprep.subr.mxu0 0.0
    %390 = vmatpush1.msra.mxu0 0.0
    %391 = vmatprep.subr.mxu0 0.0
    %392 = vmatpush1.msra.mxu0 0.0
    %393 = vmatprep.subr.mxu0 0.0
    %394 = vmatpush1.msra.mxu0 0.0
    %395 = vmatprep.subr.mxu0 0.0
    %396 = vmatpush1.msra.mxu0 0.0
    %397 = vmatprep.subr.mxu0 0.0
    %398 = vmatpush1.msra.mxu0 0.0
    %399 = vmatprep.subr.mxu0 0.0
    %400 = vmatpush1.msra.mxu0 0.0
    %401 = vmatprep.subr.mxu0 0.0
    %402 = vmatpush1.msra.mxu0 0.0
    %403 = vmatprep.subr.mxu0 0.0
    %404 = vmatpush1.msra.mxu0 %v371
    %405 = vmatprep.subr.mxu0 0.0
    %406 = vmatpush2.msra.mxu0 0.0
    %407 = vmatprep.subr.mxu0 0.0
    %408 = vmatpush2.msra.mxu0 0.0
    %409 = vmatprep.subr.mxu0 0.0
    %410 = vmatpush2.msra.mxu0 0.0
    %411 = vmatprep.subr.mxu0 0.0
    %412 = vmatpush2.msra.mxu0 0.0
    %413 = vmatprep.subr.mxu0 0.0
    %414 = vmatpush2.msra.mxu0 0.0
    %415 = vmatprep.subr.mxu0 0.0
    %416 = vmatpush2.msra.mxu0 0.0
    %417 = vmatprep.subr.mxu0 0.0
    %418 = vmatpush2.msra.mxu0 0.0
    %419 = vmatprep.subr.mxu0 0.0
    %420 = vmatpush2.msra.mxu0 0.0
    %421 = vmatprep.subr.mxu0 0.0
    %422 = vmatpush2.msra.mxu0 0.0
    %423 = vmatprep.subr.mxu0 0.0
    %424 = vmatpush2.msra.mxu0 0.0
    %425 = vmatprep.subr.mxu0 0.0
    %426 = vmatpush2.msra.mxu0 0.0
    %427 = vmatprep.subr.mxu0 0.0
    %428 = vmatpush2.msra.mxu0 0.0
    %429 = vmatprep.subr.mxu0 0.0
    %430 = vmatpush2.msra.mxu0 0.0
    %431 = vmatprep.subr.mxu0 0.0
    %432 = vmatpush2.msra.mxu0 0.0
    %433 = vmatprep.subr.mxu0 0.0
    %434 = vmatpush2.msra.mxu0 0.0
    %435 = vmatprep.subr.mxu0 0.0
    %436 = vmatpush2.msra.mxu0 0.0
    %437 = vmatprep.mubr.f32.mxu0 0.0
    %438 = vmatmul.mubr.f32.gmra.mxu0 %v364
    %v439 = vpop.f32.mrf.mxu0
    %v440 = vadd.f32 %v361, %v439
    %v441 = vpop.f32.mrf.mxu0
    %442 = vmatprep.mubr.f32.mxu0 0.0
    %443 = vmatmul.mubr.f32.gmra.mxu0 %v367
    %v444 = vpop.f32.mrf.mxu0
    %v445 = vadd.f32 %v361, %v444
    %v446 = vpop.f32.mrf.mxu0
    %447 = vdwg.mxu0
    %v448 = vmax.f32 %v440, 0.0
    %v449 = vmax.f32 %v445, 0.0
    %v450 = vld [vmem:[%s5] sm:$0xf]
    %v451 = vld [vmem:[%s6] sm:$0xf]
    %453 = vset.pattern.permute.xlu0 0
    %454 = vperm.xlu0 %453, %v451
    %v455 = vpop.permute.xlu0 %454
    %vm457 = vcmask 261120
    %v459 = vsel %vm457, %v450, 0
    %v462 = vsel %vm457, %v448, 0
    %v465 = vsel %vm457, %v449, 0
    %467 = vmatprep.subr.mxu0 0.0
    %468 = vmatpush1.xpose.msra.mxu0 0.0
    %469 = vmatprep.subr.mxu0 0.0
    %470 = vmatpush1.xpose.msra.mxu0 0.0
    %471 = vmatprep.subr.mxu0 0.0
    %472 = vmatpush1.xpose.msra.mxu0 0.0
    %473 = vmatprep.subr.mxu0 0.0
    %474 = vmatpush1.xpose.msra.mxu0 0.0
    %475 = vmatprep.subr.mxu0 0.0
    %476 = vmatpush1.xpose.msra.mxu0 0.0
    %477 = vmatprep.subr.mxu0 0.0
    %478 = vmatpush1.xpose.msra.mxu0 0.0
    %479 = vmatprep.subr.mxu0 0.0
    %480 = vmatpush1.xpose.msra.mxu0 0.0
    %481 = vmatprep.subr.mxu0 0.0
    %482 = vmatpush1.xpose.msra.mxu0 0.0
    %483 = vmatprep.subr.mxu0 0.0
    %484 = vmatpush1.xpose.msra.mxu0 0.0
    %485 = vmatprep.subr.mxu0 0.0
    %486 = vmatpush1.xpose.msra.mxu0 0.0
    %487 = vmatprep.subr.mxu0 0.0
    %488 = vmatpush1.xpose.msra.mxu0 0.0
    %489 = vmatprep.subr.mxu0 0.0
    %490 = vmatpush1.xpose.msra.mxu0 0.0
    %491 = vmatprep.subr.mxu0 0.0
    %492 = vmatpush1.xpose.msra.mxu0 0.0
    %493 = vmatprep.subr.mxu0 0.0
    %494 = vmatpush1.xpose.msra.mxu0 0.0
    %495 = vmatprep.subr.mxu0 0.0
    %496 = vmatpush1.xpose.msra.mxu0 %v465
    %497 = vmatprep.subr.mxu0 0.0
    %498 = vmatpush1.xpose.msra.mxu0 %v462
    %499 = vmatprep.subr.mxu0 0.0
    %500 = vmatpush2.xpose.msra.mxu0 0.0
    %501 = vmatprep.subr.mxu0 0.0
    %502 = vmatpush2.xpose.msra.mxu0 0.0
    %503 = vmatprep.subr.mxu0 0.0
    %504 = vmatpush2.xpose.msra.mxu0 0.0
    %505 = vmatprep.subr.mxu0 0.0
    %506 = vmatpush2.xpose.msra.mxu0 0.0
    %507 = vmatprep.subr.mxu0 0.0
    %508 = vmatpush2.xpose.msra.mxu0 0.0
    %509 = vmatprep.subr.mxu0 0.0
    %510 = vmatpush2.xpose.msra.mxu0 0.0
    %511 = vmatprep.subr.mxu0 0.0
    %512 = vmatpush2.xpose.msra.mxu0 0.0
    %513 = vmatprep.subr.mxu0 0.0
    %514 = vmatpush2.xpose.msra.mxu0 0.0
    %515 = vmatprep.subr.mxu0 0.0
    %516 = vmatpush2.xpose.msra.mxu0 0.0
    %517 = vmatprep.subr.mxu0 0.0
    %518 = vmatpush2.xpose.msra.mxu0 0.0
    %519 = vmatprep.subr.mxu0 0.0
    %520 = vmatpush2.xpose.msra.mxu0 0.0
    %521 = vmatprep.subr.mxu0 0.0
    %522 = vmatpush2.xpose.msra.mxu0 0.0
    %523 = vmatprep.subr.mxu0 0.0
    %524 = vmatpush2.xpose.msra.mxu0 0.0
    %525 = vmatprep.subr.mxu0 0.0
    %526 = vmatpush2.xpose.msra.mxu0 0.0
    %527 = vmatprep.subr.mxu0 0.0
    %528 = vmatpush2.xpose.msra.mxu0 0.0
    %529 = vmatprep.subr.mxu0 0.0
    %530 = vmatpush2.xpose.msra.mxu0 0.0
    %531 = vmatprep.mubr.f32.mxu0 0.0
    %532 = vmatmul.mubr.f32.gmra.mxu0 %v459
    %v533 = vpop.f32.mrf.mxu0
    %v534 = vadd.f32 %v455, %v533
    %v535 = vpop.f32.mrf.mxu0
    %536 = vdwg.mxu0
    %vm537 = vcmask 125952
    %538 = vst.msk [vmem:[#allocation2] sm:$0xf] %vm537, %v534
    // Predicated region
    $region30: #{tpu_custom_call.1} parent=1 // pred_check
      _
    $region31: #{tpu_custom_call.1} parent=1 // pred_check_branch
      %540 = sbr.rel (0) target = $region33
    $region32: #{tpu_custom_call.1} parent=1 // pred_region
      %s542 = ssub.s32 64, 64
      %543 = vsyncadd [#allocation3], %s542
      %s545 = sshll.u32 [#allocation2], 4
      %s546 = int_to_ptr.vmem [resolvable:$true] %s545
      %548 = dma.vmem_to_hbm [thread:$0]  %s546, 64, %s7, [#allocation3]
    $region33: #{tpu_custom_call.1} parent=1 // pred_fallthru
      _
    // Predicated region
    $region34: #{tpu_custom_call.1} parent=1 // pred_check
      _
    $region35: #{tpu_custom_call.1} parent=1 // pred_check_branch
      %550 = sbr.rel (0) target = $region37
    $region36: #{tpu_custom_call.1} parent=1 // pred_region
      %551 = dma.done [#allocation3], 64
    $region37: #{tpu_custom_call.1} parent=1 // pred_fallthru
      _
    %552 = vsyncpa [#allocation3], 1

</llo_original>
